<compile_context>
chip_gen: v7x
topology: tpu7x:2x2x1
jax: 0.10.0
libtpu: 0.0.40
codegen_flags: <defaults>
</compile_context>

<pallas_src>
import numpy as np
import jax
import jax.numpy as jnp
from jax.experimental import pallas as pl
from jax.experimental.pallas import tpu as pltpu


def power_spectrum_kernel(v_ref, o_ref):
    """One grid cell = one (species a_i, sample tile), all angular channels.

    v_ref: (S_tile, L, M_max, Q) spherical-expansion coefficients (m zero-padded)
    o_ref: (S_tile, L, Q, Q)     cg_l * sum_m outer(V[s,l,m,:], V[s,l,m,:])
    """
    _, L, _, Q = v_ref.shape
    for l in range(L):                              # static unroll, L is small
        cg = float(1.0 / np.sqrt(2.0 * l + 1.0))    # compile-time constant
        acc = None
        for m in range(2 * l + 1):                  # skip zero-padded m rows
            vm = v_ref[:, l, m, :]                  # (S_tile, Q)
            # VPU broadcast outer product (no MXU for tiny Q x M x Q contraction)
            term = vm[:, :, None] * vm[:, None, :]  # (S_tile, Q, Q)
            acc = term if acc is None else acc + term
        # scale once per (S,Q,Q) block (Q*Q <= (2l+1)*Q here, cheapest place)
        o_ref[:, l, :, :] = cg * acc


def _choose_s_tile(s, max_tile=512):
    """Largest divisor of s not exceeding max_tile (measured sweet spot ~512)."""
    best = 1
    for t in range(1, min(s, max_tile) + 1):
        if s % t == 0:
            best = t
    return best


def _padded_tile_bytes(shape, itemsize=4):
    """VMEM footprint of one block, with (8,128) padding on the last two dims."""
    lead = int(np.prod(shape[:-2], dtype=np.int64)) if len(shape) > 2 else 1
    s2 = -(-shape[-2] // 8) * 8
    s1 = -(-shape[-1] // 128) * 128
    return lead * s2 * s1 * itemsize


def power_spectrum(values):
    """values: (A, S, L, M_max, Q) float32 -> (A, S, L*Q*Q) invariants."""
    A, S, L, M, Q = values.shape
    s_tile = _choose_s_tile(S)

    # double-buffered input + output blocks (Buffered(2) default)
    vmem_needed = 2 * (_padded_tile_bytes((s_tile, L, M, Q)) +
                       _padded_tile_bytes((s_tile, L, Q, Q)))
    vmem_limit = int(min(max(2 * vmem_needed, 32 * 2**20), 48 * 2**20))

    out = pl.pallas_call(
        power_spectrum_kernel,
        out_shape=jax.ShapeDtypeStruct((A, S, L, Q, Q), jnp.float32),
        grid=(A, S // s_tile),
        in_specs=[
            pl.BlockSpec((None, s_tile, L, M, Q),
                         lambda a, s: (a, s, 0, 0, 0)),
        ],
        out_specs=pl.BlockSpec((None, s_tile, L, Q, Q),
                               lambda a, s: (a, s, 0, 0, 0)),
        compiler_params=pltpu.CompilerParams(
            dimension_semantics=("parallel", "parallel"),
            vmem_limit_bytes=vmem_limit),
    )(values)

    # l-major, (q_nu, q_1)-minor feature concatenation == contiguous collapse
    # of the trailing (L, Q, Q) axes: free reshape, no HBM transpose.
    return out.reshape(A, S, L * Q * Q)


def build_property_metadata(l_max, Q, nu=1, prop_names=("n1",)):
    """Plain-python mirror of the properties bookkeeping in forward()."""
    properties_names = [f"{n}" for n in prop_names] + \
                       [f"{n[:-1]}{nu + 1}" for n in prop_names]
    properties_values = []
    selected_features = {}
    for l in range(l_max + 1):
        selected_features[l] = []
        for q_nu in range(Q):
            for q_1 in range(Q):
                # synthetic property value == radial index itself
                properties_values.append([q_nu, q_1])
                selected_features[l].append([q_nu, q_1])
    return (properties_names,
            np.asarray(properties_values, dtype=np.int32),
            selected_features)


if __name__ == "__main__":
    # small synthetic spherical expansion
    all_species = [1, 6]          # a_i keys
    l_max = 2
    S = 8                         # samples per block
    Q = 4                         # radial / property channels
    A = len(all_species)
    L = l_max + 1
    M_max = 2 * l_max + 1

    key = jax.random.PRNGKey(0)
    # pack blocks spex.block(lam=l, a_i=a) -> V[a, :, l, :2l+1, :], zero-pad m
    values = np.zeros((A, S, L, M_max, Q), dtype=np.float32)
    for a in range(A):
        for l in range(L):
            key, sub = jax.random.split(key)
            values[a, :, l, : 2 * l + 1, :] = np.asarray(
                jax.random.normal(sub, (S, 2 * l + 1, Q), dtype=jnp.float32))
    values = jnp.asarray(values)

    data = jax.block_until_ready(power_spectrum(values))   # (A, S, L*Q*Q)

    # pure-numpy reference for correctness
    vals_np = np.asarray(values)
    ref = np.zeros((A, S, L * Q * Q), dtype=np.float64)
    for a in range(A):
        col = 0
        for l in range(L):
            m = 2 * l + 1
            v = vals_np[a, :, l, :m, :].astype(np.float64)
            cg = 1.0 / np.sqrt(2 * l + 1)
            ref[a, :, col:col + Q * Q] = cg * np.einsum(
                "smq,smp->sqp", v, v).reshape(S, Q * Q)
            col += Q * Q
    np.testing.assert_allclose(np.asarray(data), ref, rtol=1e-5, atol=1e-5)

    # metadata (keys / properties), plain python — no Pallas equivalent
    properties_names, properties_values, _ = build_property_metadata(l_max, Q)
    LE_invariants = {
        "keys": np.array([[a_i] for a_i in all_species]),       # Labels('a_i')
        "blocks": {a_i: np.asarray(data[i]) for i, a_i in enumerate(all_species)},
        "properties_names": properties_names,
        "properties_values": properties_values,
    }
    assert LE_invariants["blocks"][1].shape == (S, L * Q * Q)

    print("KERNEL_OK")
</pallas_src>

<mosaic_0001>
module attributes {stable_mosaic.version = 11 : i64} {
  func.func @power_spectrum_kernel(%arg0: i32, %arg1: i32, %arg2: memref<1x8x3x5x4xf32, #tpu.memory_space<vmem>>, %arg3: memref<1x8x3x4x4xf32, #tpu.memory_space<vmem>>) attributes {dimension_semantics = [#tpu.dimension_semantics<parallel>, #tpu.dimension_semantics<parallel>], iteration_bounds = array<i64: 2, 1>, scalar_prefetch = 0 : i64, scratch_operands = 0 : i64, tpu.core_type = #tpu.core_type<tc>, window_params = [{transform_indices = @transform_0, window_bounds = array<i64: 1, 8, 3, 5, 4>}, {transform_indices = @transform_1, window_bounds = array<i64: 1, 8, 3, 4, 4>}]} {
    %c0 = arith.constant 0 : index
    %c0_0 = arith.constant 0 : index
    %c0_1 = arith.constant 0 : index
    %c0_2 = arith.constant 0 : index
    %c0_3 = arith.constant 0 : index
    %0 = vector.load %arg2[%c0, %c0_0, %c0_1, %c0_2, %c0_3] : memref<1x8x3x5x4xf32, #tpu.memory_space<vmem>>, vector<1x8x1x1x4xf32>
    %1 = vector.shape_cast %0 : vector<1x8x1x1x4xf32> to vector<8x4xf32>
    %2 = vector.shape_cast %1 : vector<8x4xf32> to vector<8x4x1xf32>
    %3 = vector.shape_cast %1 : vector<8x4xf32> to vector<8x1x4xf32>
    %4 = vector.broadcast %2 : vector<8x4x1xf32> to vector<8x4x4xf32>
    %5 = vector.broadcast %3 : vector<8x1x4xf32> to vector<8x4x4xf32>
    %6 = arith.mulf %4, %5 : vector<8x4x4xf32>
    %cst = arith.constant 1.000000e+00 : f32
    %7 = vector.broadcast %cst : f32 to vector<8x4x4xf32>
    %8 = arith.mulf %7, %6 : vector<8x4x4xf32>
    %c0_4 = arith.constant 0 : index
    %c0_5 = arith.constant 0 : index
    %c0_6 = arith.constant 0 : index
    %c0_7 = arith.constant 0 : index
    %c0_8 = arith.constant 0 : index
    %9 = vector.load %arg3[%c0_4, %c0_5, %c0_6, %c0_7, %c0_8] : memref<1x8x3x4x4xf32, #tpu.memory_space<vmem>>, vector<1x8x1x4x4xf32>
    %10 = vector.shape_cast %9 : vector<1x8x1x4x4xf32> to vector<8x4x4xf32>
    %11 = vector.shape_cast %8 : vector<8x4x4xf32> to vector<1x8x1x4x4xf32>
    tpu.vector_store %arg3[%c0_4, %c0_5, %c0_6, %c0_7, %c0_8], %11 {strides = array<i32>} : memref<1x8x3x4x4xf32, #tpu.memory_space<vmem>>, vector<1x8x1x4x4xf32>,
    %c0_9 = arith.constant 0 : index
    %c0_10 = arith.constant 0 : index
    %c1 = arith.constant 1 : index
    %c0_11 = arith.constant 0 : index
    %c0_12 = arith.constant 0 : index
    %12 = vector.load %arg2[%c0_9, %c0_10, %c1, %c0_11, %c0_12] : memref<1x8x3x5x4xf32, #tpu.memory_space<vmem>>, vector<1x8x1x1x4xf32>
    %13 = vector.shape_cast %12 : vector<1x8x1x1x4xf32> to vector<8x4xf32>
    %14 = vector.shape_cast %13 : vector<8x4xf32> to vector<8x4x1xf32>
    %15 = vector.shape_cast %13 : vector<8x4xf32> to vector<8x1x4xf32>
    %16 = vector.broadcast %14 : vector<8x4x1xf32> to vector<8x4x4xf32>
    %17 = vector.broadcast %15 : vector<8x1x4xf32> to vector<8x4x4xf32>
    %18 = arith.mulf %16, %17 : vector<8x4x4xf32>
    %c0_13 = arith.constant 0 : index
    %c0_14 = arith.constant 0 : index
    %c1_15 = arith.constant 1 : index
    %c1_16 = arith.constant 1 : index
    %c0_17 = arith.constant 0 : index
    %19 = vector.load %arg2[%c0_13, %c0_14, %c1_15, %c1_16, %c0_17] : memref<1x8x3x5x4xf32, #tpu.memory_space<vmem>>, vector<1x8x1x1x4xf32>
    %20 = vector.shape_cast %19 : vector<1x8x1x1x4xf32> to vector<8x4xf32>
    %21 = vector.shape_cast %20 : vector<8x4xf32> to vector<8x4x1xf32>
    %22 = vector.shape_cast %20 : vector<8x4xf32> to vector<8x1x4xf32>
    %23 = vector.broadcast %21 : vector<8x4x1xf32> to vector<8x4x4xf32>
    %24 = vector.broadcast %22 : vector<8x1x4xf32> to vector<8x4x4xf32>
    %25 = arith.mulf %23, %24 : vector<8x4x4xf32>
    %26 = arith.addf %18, %25 : vector<8x4x4xf32>
    %c0_18 = arith.constant 0 : index
    %c0_19 = arith.constant 0 : index
    %c1_20 = arith.constant 1 : index
    %c2 = arith.constant 2 : index
    %c0_21 = arith.constant 0 : index
    %27 = vector.load %arg2[%c0_18, %c0_19, %c1_20, %c2, %c0_21] : memref<1x8x3x5x4xf32, #tpu.memory_space<vmem>>, vector<1x8x1x1x4xf32>
    %28 = vector.shape_cast %27 : vector<1x8x1x1x4xf32> to vector<8x4xf32>
    %29 = vector.shape_cast %28 : vector<8x4xf32> to vector<8x4x1xf32>
    %30 = vector.shape_cast %28 : vector<8x4xf32> to vector<8x1x4xf32>
    %31 = vector.broadcast %29 : vector<8x4x1xf32> to vector<8x4x4xf32>
    %32 = vector.broadcast %30 : vector<8x1x4xf32> to vector<8x4x4xf32>
    %33 = arith.mulf %31, %32 : vector<8x4x4xf32>
    %34 = arith.addf %26, %33 : vector<8x4x4xf32>
    %cst_22 = arith.constant 0.577350259 : f32
    %35 = vector.broadcast %cst_22 : f32 to vector<8x4x4xf32>
    %36 = arith.mulf %35, %34 : vector<8x4x4xf32>
    %c0_23 = arith.constant 0 : index
    %c0_24 = arith.constant 0 : index
    %c1_25 = arith.constant 1 : index
    %c0_26 = arith.constant 0 : index
    %c0_27 = arith.constant 0 : index
    %37 = vector.load %arg3[%c0_23, %c0_24, %c1_25, %c0_26, %c0_27] : memref<1x8x3x4x4xf32, #tpu.memory_space<vmem>>, vector<1x8x1x4x4xf32>
    %38 = vector.shape_cast %37 : vector<1x8x1x4x4xf32> to vector<8x4x4xf32>
    %39 = vector.shape_cast %36 : vector<8x4x4xf32> to vector<1x8x1x4x4xf32>
    tpu.vector_store %arg3[%c0_23, %c0_24, %c1_25, %c0_26, %c0_27], %39 {strides = array<i32>} : memref<1x8x3x4x4xf32, #tpu.memory_space<vmem>>, vector<1x8x1x4x4xf32>,
    %c0_28 = arith.constant 0 : index
    %c0_29 = arith.constant 0 : index
    %c2_30 = arith.constant 2 : index
    %c0_31 = arith.constant 0 : index
    %c0_32 = arith.constant 0 : index
    %40 = vector.load %arg2[%c0_28, %c0_29, %c2_30, %c0_31, %c0_32] : memref<1x8x3x5x4xf32, #tpu.memory_space<vmem>>, vector<1x8x1x1x4xf32>
    %41 = vector.shape_cast %40 : vector<1x8x1x1x4xf32> to vector<8x4xf32>
    %42 = vector.shape_cast %41 : vector<8x4xf32> to vector<8x4x1xf32>
    %43 = vector.shape_cast %41 : vector<8x4xf32> to vector<8x1x4xf32>
    %44 = vector.broadcast %42 : vector<8x4x1xf32> to vector<8x4x4xf32>
    %45 = vector.broadcast %43 : vector<8x1x4xf32> to vector<8x4x4xf32>
    %46 = arith.mulf %44, %45 : vector<8x4x4xf32>
    %c0_33 = arith.constant 0 : index
    %c0_34 = arith.constant 0 : index
    %c2_35 = arith.constant 2 : index
    %c1_36 = arith.constant 1 : index
    %c0_37 = arith.constant 0 : index
    %47 = vector.load %arg2[%c0_33, %c0_34, %c2_35, %c1_36, %c0_37] : memref<1x8x3x5x4xf32, #tpu.memory_space<vmem>>, vector<1x8x1x1x4xf32>
    %48 = vector.shape_cast %47 : vector<1x8x1x1x4xf32> to vector<8x4xf32>
    %49 = vector.shape_cast %48 : vector<8x4xf32> to vector<8x4x1xf32>
    %50 = vector.shape_cast %48 : vector<8x4xf32> to vector<8x1x4xf32>
    %51 = vector.broadcast %49 : vector<8x4x1xf32> to vector<8x4x4xf32>
    %52 = vector.broadcast %50 : vector<8x1x4xf32> to vector<8x4x4xf32>
    %53 = arith.mulf %51, %52 : vector<8x4x4xf32>
    %54 = arith.addf %46, %53 : vector<8x4x4xf32>
    %c0_38 = arith.constant 0 : index
    %c0_39 = arith.constant 0 : index
    %c2_40 = arith.constant 2 : index
    %c2_41 = arith.constant 2 : index
    %c0_42 = arith.constant 0 : index
    %55 = vector.load %arg2[%c0_38, %c0_39, %c2_40, %c2_41, %c0_42] : memref<1x8x3x5x4xf32, #tpu.memory_space<vmem>>, vector<1x8x1x1x4xf32>
    %56 = vector.shape_cast %55 : vector<1x8x1x1x4xf32> to vector<8x4xf32>
    %57 = vector.shape_cast %56 : vector<8x4xf32> to vector<8x4x1xf32>
    %58 = vector.shape_cast %56 : vector<8x4xf32> to vector<8x1x4xf32>
    %59 = vector.broadcast %57 : vector<8x4x1xf32> to vector<8x4x4xf32>
    %60 = vector.broadcast %58 : vector<8x1x4xf32> to vector<8x4x4xf32>
    %61 = arith.mulf %59, %60 : vector<8x4x4xf32>
    %62 = arith.addf %54, %61 : vector<8x4x4xf32>
    %c0_43 = arith.constant 0 : index
    %c0_44 = arith.constant 0 : index
    %c2_45 = arith.constant 2 : index
    %c3 = arith.constant 3 : index
    %c0_46 = arith.constant 0 : index
    %63 = vector.load %arg2[%c0_43, %c0_44, %c2_45, %c3, %c0_46] : memref<1x8x3x5x4xf32, #tpu.memory_space<vmem>>, vector<1x8x1x1x4xf32>
    %64 = vector.shape_cast %63 : vector<1x8x1x1x4xf32> to vector<8x4xf32>
    %65 = vector.shape_cast %64 : vector<8x4xf32> to vector<8x4x1xf32>
    %66 = vector.shape_cast %64 : vector<8x4xf32> to vector<8x1x4xf32>
    %67 = vector.broadcast %65 : vector<8x4x1xf32> to vector<8x4x4xf32>
    %68 = vector.broadcast %66 : vector<8x1x4xf32> to vector<8x4x4xf32>
    %69 = arith.mulf %67, %68 : vector<8x4x4xf32>
    %70 = arith.addf %62, %69 : vector<8x4x4xf32>
    %c0_47 = arith.constant 0 : index
    %c0_48 = arith.constant 0 : index
    %c2_49 = arith.constant 2 : index
    %c4 = arith.constant 4 : index
    %c0_50 = arith.constant 0 : index
    %71 = vector.load %arg2[%c0_47, %c0_48, %c2_49, %c4, %c0_50] : memref<1x8x3x5x4xf32, #tpu.memory_space<vmem>>, vector<1x8x1x1x4xf32>
    %72 = vector.shape_cast %71 : vector<1x8x1x1x4xf32> to vector<8x4xf32>
    %73 = vector.shape_cast %72 : vector<8x4xf32> to vector<8x4x1xf32>
    %74 = vector.shape_cast %72 : vector<8x4xf32> to vector<8x1x4xf32>
    %75 = vector.broadcast %73 : vector<8x4x1xf32> to vector<8x4x4xf32>
    %76 = vector.broadcast %74 : vector<8x1x4xf32> to vector<8x4x4xf32>
    %77 = arith.mulf %75, %76 : vector<8x4x4xf32>
    %78 = arith.addf %70, %77 : vector<8x4x4xf32>
    %cst_51 = arith.constant 0.44721359 : f32
    %79 = vector.broadcast %cst_51 : f32 to vector<8x4x4xf32>
    %80 = arith.mulf %79, %78 : vector<8x4x4xf32>
    %c0_52 = arith.constant 0 : index
    %c0_53 = arith.constant 0 : index
    %c2_54 = arith.constant 2 : index
    %c0_55 = arith.constant 0 : index
    %c0_56 = arith.constant 0 : index
    %81 = vector.load %arg3[%c0_52, %c0_53, %c2_54, %c0_55, %c0_56] : memref<1x8x3x4x4xf32, #tpu.memory_space<vmem>>, vector<1x8x1x4x4xf32>
    %82 = vector.shape_cast %81 : vector<1x8x1x4x4xf32> to vector<8x4x4xf32>
    %83 = vector.shape_cast %80 : vector<8x4x4xf32> to vector<1x8x1x4x4xf32>
    tpu.vector_store %arg3[%c0_52, %c0_53, %c2_54, %c0_55, %c0_56], %83 {strides = array<i32>} : memref<1x8x3x4x4xf32, #tpu.memory_space<vmem>>, vector<1x8x1x4x4xf32>,
    return
  }
  func.func @transform_0(%arg0: i32, %arg1: i32) -> (i32, i32, i32, i32, i32) {
    %c0_i32 = arith.constant 0 : i32
    %c0_i32_0 = arith.constant 0 : i32
    %c0_i32_1 = arith.constant 0 : i32
    %c0_i32_2 = arith.constant 0 : i32
    return %arg0, %arg1, %c0_i32, %c0_i32_0, %c0_i32_1 : i32, i32, i32, i32, i32
  }
  func.func @transform_1(%arg0: i32, %arg1: i32) -> (i32, i32, i32, i32, i32) {
    %c0_i32 = arith.constant 0 : i32
    %c0_i32_0 = arith.constant 0 : i32
    %c0_i32_1 = arith.constant 0 : i32
    %c0_i32_2 = arith.constant 0 : i32
    return %arg0, %arg1, %c0_i32, %c0_i32_0, %c0_i32_1 : i32, i32, i32, i32, i32
  }
}

</mosaic_0001>

<llo_original>
// kernel: tpu_custom_call.1
$region0: #{tpu_custom_call.1}
  #allocation0 [shape = 'u32[]', space=smem, size = 0x4, offset = 0x4, fixed_abs, tag = 'smem constant byte address 0x4 - core index']
  #allocation1 [shape = 'u32[144,128]{1,0:T(1,128)}', space=vmem, size = 0x12000, scoped, tag = 'internal scratch']
  %s0 = inlined_call_operand.vmem [shape: f32[2,8,3,5,4], index: 0, kind: input, shape index: {}]
  %s1 = inlined_call_operand.vmem [shape: f32[2,8,3,4,4], index: 1, kind: output, shape index: {}]
  %s2 = sld [smem:[#allocation0]]
  $region37: #{tpu_custom_call.1} parent=0
    _
  %s4 = ssub.s32 1, %s2
  %s5 = scalar_select 0, %s4, %s2
  loop: start=0, step=1, limit=4
  $region2: #{tpu_custom_call.1} parent=0 // loop_pre_header
    _
  $region3: #{tpu_custom_call.1} parent=0 // loop_header
    %s7 = sphi 0, %s11
    %p8 = scmp.ge.s32.totalorder %s7, 4
    %s14 = sphi 0, %s26
    %s15 = sphi 0, %s22
    %s16 = sphi 0, %s14
    %s17 = sphi 0, %s15
    %s18 = sphi 0, %s16
    %s19 = sphi 0, %s17
    %s31 = sphi 0, %s33
    %s34 = sphi 0, %s31
    %s35 = sphi 0, %s34
    %s51 = sphi 0, %s35
    %s59 = sphi 0, %s61
    %s62 = sphi 0, %s59
    %s63 = sphi 0, %s62
    %s79 = sphi 0, %s63
  $region4: #{tpu_custom_call.1} parent=0 // loop_header_branch
    %10 = sbr.rel (%p8) target = $region8
  $region5: #{tpu_custom_call.1} parent=0 // loop_body
    %s12 = ssub.s32 %s7, 1
    %s13 = ssub.s32 %s7, 2
    %s20 = sadd.s32 1, %s15
    %p21 = scmp.ge.s32.totalorder %s20, 1
    %s22 = scalar_select %p21, 0, %s20
    %s23 = sadd.s32 1, %s14
    %s24 = scalar_select %p21, %s23, %s14
    %p25 = scmp.ge.s32.totalorder %s24, 2
    %s26 = scalar_select %p25, 0, %s24
    %s27 = ssub.s32 %s14, %s26
    %s28 = ssub.s32 %s15, %s22
    %s29 = sor.u32 %s27, %s28
    %p30 = scmp.eq.s32.totalorder %s29, 0
    %s32 = sadd.s32 %s31, 1
    %s33 = scalar_select %p30, %s31, %s32
    %p36 = pneg %p30
    %p37 = scmp.eq.s32.totalorder %s7, 1
    %p38 = por %p36, %p37
    %p39 = scmp.ne.s32.totalorder %s31, %s34
    %p40 = scmp.eq.s32.totalorder %s7, 0
    %p41 = por %p39, %p40
    %p42 = scmp.ne.s32.totalorder %s31, %s34
    %p43 = scmp.eq.s32.totalorder %s12, 1
    %p44 = por %p42, %p43
    %p45 = scmp.ne.s32.totalorder %s34, %s35
    %p46 = scmp.eq.s32.totalorder %s12, 0
    %p47 = por %p45, %p46
    %p48 = scmp.ne.s32.totalorder %s34, %s35
    %p49 = scmp.eq.s32.totalorder %s13, 1
    %p50 = por %p48, %p49
    %p52 = scmp.ne.s32.totalorder %s35, %s51
    %p53 = scmp.eq.s32.totalorder %s13, 0
    %p54 = por %p52, %p53
    %s55 = ssub.s32 %s14, %s26
    %s56 = ssub.s32 %s15, %s22
    %s57 = sor.u32 %s55, %s56
    %p58 = scmp.eq.s32.totalorder %s57, 0
    %s60 = sadd.s32 %s59, 1
    %s61 = scalar_select %p58, %s59, %s60
    %p64 = pneg %p58
    %p65 = scmp.eq.s32.totalorder %s7, 1
    %p66 = por %p64, %p65
    %p67 = scmp.ne.s32.totalorder %s59, %s62
    %p68 = scmp.eq.s32.totalorder %s7, 0
    %p69 = por %p67, %p68
    %p70 = scmp.ne.s32.totalorder %s59, %s62
    %p71 = scmp.eq.s32.totalorder %s12, 1
    %p72 = por %p70, %p71
    %p73 = scmp.ne.s32.totalorder %s62, %s63
    %p74 = scmp.eq.s32.totalorder %s12, 0
    %p75 = por %p73, %p74
    %p76 = scmp.ne.s32.totalorder %s62, %s63
    %p77 = scmp.eq.s32.totalorder %s13, 1
    %p78 = por %p76, %p77
    %p80 = scmp.ne.s32.totalorder %s63, %s79
    %p81 = scmp.eq.s32.totalorder %s13, 0
    %p82 = por %p80, %p81
    %p83 = scmp.le.s32.totalorder 1, %s7
    %p84 = scmp.lt.s32.totalorder %s7, 3
    %p85 = pnand %p83, %p84
    %p86 = pneg %p85
    // Predicated region
    $region9: #{tpu_custom_call.1} parent=5 // pred_check
      _
    $region10: #{tpu_custom_call.1} parent=5 // pred_check_branch
      %88 = sbr.rel (%p85) target = $region12
    $region11: #{tpu_custom_call.1} parent=5 // pred_region
      %s89 = ssub.s32 %s7, 1
    $region12: #{tpu_custom_call.1} parent=5 // pred_fallthru
      _
    %p90 = scmp.lt.s32.totalorder %s7, 2
    // Predicated region
    $region13: #{tpu_custom_call.1} parent=5 // pred_check
      %p91 = pneg %p90
    $region14: #{tpu_custom_call.1} parent=5 // pred_check_branch
      %93 = sbr.rel (%p91) target = $region16
    $region15: #{tpu_custom_call.1} parent=5 // pred_region
      // Predicated region
      $region17: #{tpu_custom_call.1} parent=15 // pred_check
        %p94 = pneg %p41
      $region18: #{tpu_custom_call.1} parent=15 // pred_check_branch
        %96 = sbr.rel (%p94) target = $region20
      $region19: #{tpu_custom_call.1} parent=15 // pred_region
        %s97 = smul.u32 8, %s15
        %p98 = scmp.lt.s32.totalorder %s14, 1
        %s99 = scalar_select %p98, %s14, 1
        %p100 = scmp.lt.s32.totalorder %s97, 7
        %s101 = scalar_select %p100, %s97, 7
        %s102 = smul.addr %s101, 3
        %s103 = smul.addr %s99, 24
        %s104 = sadd.s32 %s102, %s103
        %s105 = smul.addr %s104, 8
        %s106 = scalar_lea.vmem %s0, %s105
        %s107 = smul.u32 8, %s15
      $region20: #{tpu_custom_call.1} parent=15 // pred_fallthru
        _
    $region16: #{tpu_custom_call.1} parent=5 // pred_fallthru
      _
    %p108 = scmp.le.s32.totalorder 1, %s7
    %p109 = scmp.lt.s32.totalorder %s7, 3
    %p110 = pnand %p108, %p109
    %p111 = pneg %p110
    // Predicated region
    $region21: #{tpu_custom_call.1} parent=5 // pred_check
      _
    $region22: #{tpu_custom_call.1} parent=5 // pred_check_branch
      %113 = sbr.rel (%p110) target = $region24
    $region23: #{tpu_custom_call.1} parent=5 // pred_region
      %s114 = ssub.s32 %s7, 1
      %s115 = smul.u32 8, %s17
      %p116 = scmp.lt.s32.totalorder %s16, 1
      %s117 = scalar_select %p116, %s16, 1
      %p118 = scmp.lt.s32.totalorder %s115, 7
      %s119 = scalar_select %p118, %s115, 7
      %s120 = smul.addr %s119, 3
      %s121 = smul.addr %s117, 24
      %s122 = sadd.s32 %s120, %s121
      %s123 = smul.addr %s122, 8
      %s124 = scalar_lea.vmem %s0, %s123
      %p125 = pneg %p47
      %p126 = pneg %p44
      %p127 = pneg %p75
      %p128 = pneg %p72
      %s129 = smul.u32 8, %s17
      %p130 = scmp.lt.s32.totalorder %s16, 1
      %s131 = scalar_select %p130, %s16, 1
      %p132 = scmp.lt.s32.totalorder %s129, 7
      %s133 = scalar_select %p132, %s129, 7
      %s134 = smul.addr %s133, 3
      %s135 = smul.addr %s131, 24
      %s136 = sadd.s32 %s134, %s135
      %s137 = smul.addr %s136, 4
      %s138 = scalar_lea.vmem %s1, %s137
      %s139 = smul.u32 8, %s17
      %p140 = scmp.lt.s32.totalorder %s16, 1
      %s141 = scalar_select %p140, %s16, 1
      %p142 = scmp.lt.s32.totalorder %s139, 7
      %s143 = scalar_select %p142, %s139, 7
      %s144 = smul.addr %s143, 3
      %s145 = smul.addr %s141, 24
      %s146 = sadd.s32 %s144, %s145
      %s147 = smul.addr %s146, 8
      %s148 = scalar_lea.vmem %s0, %s147
      %s149 = smul.u32 8, %s17
      %s150 = smul.u32 8, %s17
      %p151 = scmp.lt.s32.totalorder %s16, 1
      %s152 = scalar_select %p151, %s16, 1
      %p153 = scmp.lt.s32.totalorder %s150, 7
      %s154 = scalar_select %p153, %s150, 7
      %s155 = smul.addr %s154, 3
      %s156 = smul.addr %s152, 24
      %s157 = sadd.s32 %s155, %s156
      %s158 = smul.addr %s157, 4
      %s159 = scalar_lea.vmem %s1, %s158
      %s160 = smul.u32 8, %s17
      %v161 = vld [vmem:[%s148] sm:$0x1]
      %v162 = vld [vmem:[%s148 + $0x18] sm:$0x1]
      %v163 = vld [vmem:[%s148 + $0x30] sm:$0x1]
      %v164 = vld [vmem:[%s148 + $0x48] sm:$0x1]
      %v165 = vld [vmem:[%s148 + $0x60] sm:$0x1]
      %v166 = vld [vmem:[%s148 + $0x78] sm:$0x1]
      %v167 = vld [vmem:[%s148 + $0x90] sm:$0x1]
      %v168 = vld [vmem:[%s148 + $0xa8] sm:$0x1]
      %v169 = vlaneseq
      %v170 = vshrl.u32 %v169, 7
      %v171 = vsub.s32 0, %v170
      %v172 = vrot.slane %v161, %v171
      %174 = vbcast.lane.b32.xlu0 %v172, 256
      %v175 = vpop.permute.xlu0 %174
      %v176 = vlaneseq
      %v177 = vshrl.u32 %v176, 7
      %v178 = vsub.s32 0, %v177
      %v179 = vrot.slane %v162, %v178
      %181 = vbcast.lane.b32.xlu0 %v179, 256
      %v182 = vpop.permute.xlu0 %181
      %v183 = vlaneseq
      %v184 = vshrl.u32 %v183, 7
      %v185 = vsub.s32 0, %v184
      %v186 = vrot.slane %v163, %v185
      %188 = vbcast.lane.b32.xlu0 %v186, 256
      %v189 = vpop.permute.xlu0 %188
      %v190 = vlaneseq
      %v191 = vshrl.u32 %v190, 7
      %v192 = vsub.s32 0, %v191
      %v193 = vrot.slane %v164, %v192
      %195 = vbcast.lane.b32.xlu0 %v193, 256
      %v196 = vpop.permute.xlu0 %195
      %v197 = vlaneseq
      %v198 = vshrl.u32 %v197, 7
      %v199 = vsub.s32 0, %v198
      %v200 = vrot.slane %v165, %v199
      %202 = vbcast.lane.b32.xlu0 %v200, 256
      %v203 = vpop.permute.xlu0 %202
      %v204 = vlaneseq
      %v205 = vshrl.u32 %v204, 7
      %v206 = vsub.s32 0, %v205
      %v207 = vrot.slane %v166, %v206
      %209 = vbcast.lane.b32.xlu0 %v207, 256
      %v210 = vpop.permute.xlu0 %209
      %v211 = vlaneseq
      %v212 = vshrl.u32 %v211, 7
      %v213 = vsub.s32 0, %v212
      %v214 = vrot.slane %v167, %v213
      %216 = vbcast.lane.b32.xlu0 %v214, 256
      %v217 = vpop.permute.xlu0 %216
      %v218 = vlaneseq
      %v219 = vshrl.u32 %v218, 7
      %v220 = vsub.s32 0, %v219
      %v221 = vrot.slane %v168, %v220
      %223 = vbcast.lane.b32.xlu0 %v221, 256
      %v224 = vpop.permute.xlu0 %223
      %v225 = vmul.f32 %v175, %v172
      %v226 = vmul.f32 %v182, %v179
      %v227 = vmul.f32 %v189, %v186
      %v228 = vmul.f32 %v196, %v193
      %v229 = vmul.f32 %v203, %v200
      %v230 = vmul.f32 %v210, %v207
      %v231 = vmul.f32 %v217, %v214
      %v232 = vmul.f32 %v224, %v221
      %vm233 = vcmask 27648
      %234 = vst.msk [vmem:[%s159] sm:$0xf] %vm233, %v225
      %235 = vst.msk [vmem:[%s159 + $0xc] sm:$0xf] %vm233, %v226
      %236 = vst.msk [vmem:[%s159 + $0x18] sm:$0xf] %vm233, %v227
      %237 = vst.msk [vmem:[%s159 + $0x24] sm:$0xf] %vm233, %v228
      %238 = vst.msk [vmem:[%s159 + $0x30] sm:$0xf] %vm233, %v229
      %239 = vst.msk [vmem:[%s159 + $0x3c] sm:$0xf] %vm233, %v230
      %240 = vst.msk [vmem:[%s159 + $0x48] sm:$0xf] %vm233, %v231
      %241 = vst.msk [vmem:[%s159 + $0x54] sm:$0xf] %vm233, %v232
      %s242 = scalar_lea.vmem %s148, 8
      %v243 = vld [vmem:[%s242] sm:$0x1]
      %v244 = vld [vmem:[%s242 + $0x18] sm:$0x1]
      %v245 = vld [vmem:[%s242 + $0x30] sm:$0x1]
      %v246 = vld [vmem:[%s242 + $0x48] sm:$0x1]
      %v247 = vld [vmem:[%s242 + $0x60] sm:$0x1]
      %v248 = vld [vmem:[%s242 + $0x78] sm:$0x1]
      %v249 = vld [vmem:[%s242 + $0x90] sm:$0x1]
      %v250 = vld [vmem:[%s242 + $0xa8] sm:$0x1]
      %v251 = vlaneseq
      %v252 = vshrl.u32 %v251, 7
      %v253 = vsub.s32 0, %v252
      %v254 = vrot.slane %v243, %v253
      %256 = vbcast.lane.b32.xlu0 %v254, 256
      %v257 = vpop.permute.xlu0 %256
      %v258 = vlaneseq
      %v259 = vshrl.u32 %v258, 7
      %v260 = vsub.s32 0, %v259
      %v261 = vrot.slane %v244, %v260
      %263 = vbcast.lane.b32.xlu0 %v261, 256
      %v264 = vpop.permute.xlu0 %263
      %v265 = vlaneseq
      %v266 = vshrl.u32 %v265, 7
      %v267 = vsub.s32 0, %v266
      %v268 = vrot.slane %v245, %v267
      %270 = vbcast.lane.b32.xlu0 %v268, 256
      %v271 = vpop.permute.xlu0 %270
      %v272 = vlaneseq
      %v273 = vshrl.u32 %v272, 7
      %v274 = vsub.s32 0, %v273
      %v275 = vrot.slane %v246, %v274
      %277 = vbcast.lane.b32.xlu0 %v275, 256
      %v278 = vpop.permute.xlu0 %277
      %v279 = vlaneseq
      %v280 = vshrl.u32 %v279, 7
      %v281 = vsub.s32 0, %v280
      %v282 = vrot.slane %v247, %v281
      %284 = vbcast.lane.b32.xlu0 %v282, 256
      %v285 = vpop.permute.xlu0 %284
      %v286 = vlaneseq
      %v287 = vshrl.u32 %v286, 7
      %v288 = vsub.s32 0, %v287
      %v289 = vrot.slane %v248, %v288
      %291 = vbcast.lane.b32.xlu0 %v289, 256
      %v292 = vpop.permute.xlu0 %291
      %v293 = vlaneseq
      %v294 = vshrl.u32 %v293, 7
      %v295 = vsub.s32 0, %v294
      %v296 = vrot.slane %v249, %v295
      %298 = vbcast.lane.b32.xlu0 %v296, 256
      %v299 = vpop.permute.xlu0 %298
      %v300 = vlaneseq
      %v301 = vshrl.u32 %v300, 7
      %v302 = vsub.s32 0, %v301
      %v303 = vrot.slane %v250, %v302
      %305 = vbcast.lane.b32.xlu0 %v303, 256
      %v306 = vpop.permute.xlu0 %305
      %v307 = vmul.f32 %v257, %v254
      %v308 = vmul.f32 %v264, %v261
      %v309 = vmul.f32 %v271, %v268
      %v310 = vmul.f32 %v278, %v275
      %v311 = vmul.f32 %v285, %v282
      %v312 = vmul.f32 %v292, %v289
      %v313 = vmul.f32 %v299, %v296
      %v314 = vmul.f32 %v306, %v303
      %v315 = vld [vmem:[%s242 + $0x1] sm:$0x1]
      %v316 = vld [vmem:[%s242 + $0x19] sm:$0x1]
      %v317 = vld [vmem:[%s242 + $0x31] sm:$0x1]
      %v318 = vld [vmem:[%s242 + $0x49] sm:$0x1]
      %v319 = vld [vmem:[%s242 + $0x61] sm:$0x1]
      %v320 = vld [vmem:[%s242 + $0x79] sm:$0x1]
      %v321 = vld [vmem:[%s242 + $0x91] sm:$0x1]
      %v322 = vld [vmem:[%s242 + $0xa9] sm:$0x1]
      %v323 = vlaneseq
      %v324 = vshrl.u32 %v323, 7
      %v325 = vsub.s32 0, %v324
      %v326 = vrot.slane %v315, %v325
      %328 = vbcast.lane.b32.xlu0 %v326, 256
      %v329 = vpop.permute.xlu0 %328
      %v330 = vlaneseq
      %v331 = vshrl.u32 %v330, 7
      %v332 = vsub.s32 0, %v331
      %v333 = vrot.slane %v316, %v332
      %335 = vbcast.lane.b32.xlu0 %v333, 256
      %v336 = vpop.permute.xlu0 %335
      %v337 = vlaneseq
      %v338 = vshrl.u32 %v337, 7
      %v339 = vsub.s32 0, %v338
      %v340 = vrot.slane %v317, %v339
      %342 = vbcast.lane.b32.xlu0 %v340, 256
      %v343 = vpop.permute.xlu0 %342
      %v344 = vlaneseq
      %v345 = vshrl.u32 %v344, 7
      %v346 = vsub.s32 0, %v345
      %v347 = vrot.slane %v318, %v346
      %349 = vbcast.lane.b32.xlu0 %v347, 256
      %v350 = vpop.permute.xlu0 %349
      %v351 = vlaneseq
      %v352 = vshrl.u32 %v351, 7
      %v353 = vsub.s32 0, %v352
      %v354 = vrot.slane %v319, %v353
      %356 = vbcast.lane.b32.xlu0 %v354, 256
      %v357 = vpop.permute.xlu0 %356
      %v358 = vlaneseq
      %v359 = vshrl.u32 %v358, 7
      %v360 = vsub.s32 0, %v359
      %v361 = vrot.slane %v320, %v360
      %363 = vbcast.lane.b32.xlu0 %v361, 256
      %v364 = vpop.permute.xlu0 %363
      %v365 = vlaneseq
      %v366 = vshrl.u32 %v365, 7
      %v367 = vsub.s32 0, %v366
      %v368 = vrot.slane %v321, %v367
      %370 = vbcast.lane.b32.xlu0 %v368, 256
      %v371 = vpop.permute.xlu0 %370
      %v372 = vlaneseq
      %v373 = vshrl.u32 %v372, 7
      %v374 = vsub.s32 0, %v373
      %v375 = vrot.slane %v322, %v374
      %377 = vbcast.lane.b32.xlu0 %v375, 256
      %v378 = vpop.permute.xlu0 %377
      %v379 = vmul.f32 %v329, %v326
      %v380 = vmul.f32 %v336, %v333
      %v381 = vmul.f32 %v343, %v340
      %v382 = vmul.f32 %v350, %v347
      %v383 = vmul.f32 %v357, %v354
      %v384 = vmul.f32 %v364, %v361
      %v385 = vmul.f32 %v371, %v368
      %v386 = vmul.f32 %v378, %v375
      %v387 = vadd.f32 %v307, %v379
      %v388 = vadd.f32 %v308, %v380
      %v389 = vadd.f32 %v309, %v381
      %v390 = vadd.f32 %v310, %v382
      %v391 = vadd.f32 %v311, %v383
      %v392 = vadd.f32 %v312, %v384
      %v393 = vadd.f32 %v313, %v385
      %v394 = vadd.f32 %v314, %v386
      %v395 = vld [vmem:[%s242 + $0x2] sm:$0x1]
      %v396 = vld [vmem:[%s242 + $0x1a] sm:$0x1]
      %v397 = vld [vmem:[%s242 + $0x32] sm:$0x1]
      %v398 = vld [vmem:[%s242 + $0x4a] sm:$0x1]
      %v399 = vld [vmem:[%s242 + $0x62] sm:$0x1]
      %v400 = vld [vmem:[%s242 + $0x7a] sm:$0x1]
      %v401 = vld [vmem:[%s242 + $0x92] sm:$0x1]
      %v402 = vld [vmem:[%s242 + $0xaa] sm:$0x1]
      %v403 = vlaneseq
      %v404 = vshrl.u32 %v403, 7
      %v405 = vsub.s32 0, %v404
      %v406 = vrot.slane %v395, %v405
      %408 = vbcast.lane.b32.xlu0 %v406, 256
      %v409 = vpop.permute.xlu0 %408
      %v410 = vlaneseq
      %v411 = vshrl.u32 %v410, 7
      %v412 = vsub.s32 0, %v411
      %v413 = vrot.slane %v396, %v412
      %415 = vbcast.lane.b32.xlu0 %v413, 256
      %v416 = vpop.permute.xlu0 %415
      %v417 = vlaneseq
      %v418 = vshrl.u32 %v417, 7
      %v419 = vsub.s32 0, %v418
      %v420 = vrot.slane %v397, %v419
      %422 = vbcast.lane.b32.xlu0 %v420, 256
      %v423 = vpop.permute.xlu0 %422
      %v424 = vlaneseq
      %v425 = vshrl.u32 %v424, 7
      %v426 = vsub.s32 0, %v425
      %v427 = vrot.slane %v398, %v426
      %429 = vbcast.lane.b32.xlu0 %v427, 256
      %v430 = vpop.permute.xlu0 %429
      %v431 = vlaneseq
      %v432 = vshrl.u32 %v431, 7
      %v433 = vsub.s32 0, %v432
      %v434 = vrot.slane %v399, %v433
      %436 = vbcast.lane.b32.xlu0 %v434, 256
      %v437 = vpop.permute.xlu0 %436
      %v438 = vlaneseq
      %v439 = vshrl.u32 %v438, 7
      %v440 = vsub.s32 0, %v439
      %v441 = vrot.slane %v400, %v440
      %443 = vbcast.lane.b32.xlu0 %v441, 256
      %v444 = vpop.permute.xlu0 %443
      %v445 = vlaneseq
      %v446 = vshrl.u32 %v445, 7
      %v447 = vsub.s32 0, %v446
      %v448 = vrot.slane %v401, %v447
      %450 = vbcast.lane.b32.xlu0 %v448, 256
      %v451 = vpop.permute.xlu0 %450
      %v452 = vlaneseq
      %v453 = vshrl.u32 %v452, 7
      %v454 = vsub.s32 0, %v453
      %v455 = vrot.slane %v402, %v454
      %457 = vbcast.lane.b32.xlu0 %v455, 256
      %v458 = vpop.permute.xlu0 %457
      %v459 = vmul.f32 %v409, %v406
      %v460 = vmul.f32 %v416, %v413
      %v461 = vmul.f32 %v423, %v420
      %v462 = vmul.f32 %v430, %v427
      %v463 = vmul.f32 %v437, %v434
      %v464 = vmul.f32 %v444, %v441
      %v465 = vmul.f32 %v451, %v448
      %v466 = vmul.f32 %v458, %v455
      %v467 = vadd.f32 %v387, %v459
      %v468 = vadd.f32 %v388, %v460
      %v469 = vadd.f32 %v389, %v461
      %v470 = vadd.f32 %v390, %v462
      %v471 = vadd.f32 %v391, %v463
      %v472 = vadd.f32 %v392, %v464
      %v473 = vadd.f32 %v393, %v465
      %v474 = vadd.f32 %v394, %v466
      %v475 = vmul.f32 %v467, 0.57735026
      %v476 = vmul.f32 %v468, 0.57735026
      %v477 = vmul.f32 %v469, 0.57735026
      %v478 = vmul.f32 %v470, 0.57735026
      %v479 = vmul.f32 %v471, 0.57735026
      %v480 = vmul.f32 %v472, 0.57735026
      %v481 = vmul.f32 %v473, 0.57735026
      %v482 = vmul.f32 %v474, 0.57735026
      %s483 = scalar_lea.vmem %s159, 4
      %484 = vst.msk [vmem:[%s483] sm:$0xf] %vm233, %v475
      %485 = vst.msk [vmem:[%s483 + $0xc] sm:$0xf] %vm233, %v476
      %486 = vst.msk [vmem:[%s483 + $0x18] sm:$0xf] %vm233, %v477
      %487 = vst.msk [vmem:[%s483 + $0x24] sm:$0xf] %vm233, %v478
      %488 = vst.msk [vmem:[%s483 + $0x30] sm:$0xf] %vm233, %v479
      %489 = vst.msk [vmem:[%s483 + $0x3c] sm:$0xf] %vm233, %v480
      %490 = vst.msk [vmem:[%s483 + $0x48] sm:$0xf] %vm233, %v481
      %491 = vst.msk [vmem:[%s483 + $0x54] sm:$0xf] %vm233, %v482
      %s492 = scalar_lea.vmem %s148, 16
      %v493 = vld [vmem:[%s492] sm:$0x1]
      %v494 = vld [vmem:[%s492 + $0x18] sm:$0x1]
      %v495 = vld [vmem:[%s492 + $0x30] sm:$0x1]
      %v496 = vld [vmem:[%s492 + $0x48] sm:$0x1]
      %v497 = vld [vmem:[%s492 + $0x60] sm:$0x1]
      %v498 = vld [vmem:[%s492 + $0x78] sm:$0x1]
      %v499 = vld [vmem:[%s492 + $0x90] sm:$0x1]
      %v500 = vld [vmem:[%s492 + $0xa8] sm:$0x1]
      %v501 = vlaneseq
      %v502 = vshrl.u32 %v501, 7
      %v503 = vsub.s32 0, %v502
      %v504 = vrot.slane %v493, %v503
      %506 = vbcast.lane.b32.xlu0 %v504, 256
      %v507 = vpop.permute.xlu0 %506
      %v508 = vlaneseq
      %v509 = vshrl.u32 %v508, 7
      %v510 = vsub.s32 0, %v509
      %v511 = vrot.slane %v494, %v510
      %513 = vbcast.lane.b32.xlu0 %v511, 256
      %v514 = vpop.permute.xlu0 %513
      %v515 = vlaneseq
      %v516 = vshrl.u32 %v515, 7
      %v517 = vsub.s32 0, %v516
      %v518 = vrot.slane %v495, %v517
      %520 = vbcast.lane.b32.xlu0 %v518, 256
      %v521 = vpop.permute.xlu0 %520
      %v522 = vlaneseq
      %v523 = vshrl.u32 %v522, 7
      %v524 = vsub.s32 0, %v523
      %v525 = vrot.slane %v496, %v524
      %527 = vbcast.lane.b32.xlu0 %v525, 256
      %v528 = vpop.permute.xlu0 %527
      %v529 = vlaneseq
      %v530 = vshrl.u32 %v529, 7
      %v531 = vsub.s32 0, %v530
      %v532 = vrot.slane %v497, %v531
      %534 = vbcast.lane.b32.xlu0 %v532, 256
      %v535 = vpop.permute.xlu0 %534
      %v536 = vlaneseq
      %v537 = vshrl.u32 %v536, 7
      %v538 = vsub.s32 0, %v537
      %v539 = vrot.slane %v498, %v538
      %541 = vbcast.lane.b32.xlu0 %v539, 256
      %v542 = vpop.permute.xlu0 %541
      %v543 = vlaneseq
      %v544 = vshrl.u32 %v543, 7
      %v545 = vsub.s32 0, %v544
      %v546 = vrot.slane %v499, %v545
      %548 = vbcast.lane.b32.xlu0 %v546, 256
      %v549 = vpop.permute.xlu0 %548
      %v550 = vlaneseq
      %v551 = vshrl.u32 %v550, 7
      %v552 = vsub.s32 0, %v551
      %v553 = vrot.slane %v500, %v552
      %555 = vbcast.lane.b32.xlu0 %v553, 256
      %v556 = vpop.permute.xlu0 %555
      %v557 = vmul.f32 %v507, %v504
      %v558 = vmul.f32 %v514, %v511
      %v559 = vmul.f32 %v521, %v518
      %v560 = vmul.f32 %v528, %v525
      %v561 = vmul.f32 %v535, %v532
      %v562 = vmul.f32 %v542, %v539
      %v563 = vmul.f32 %v549, %v546
      %v564 = vmul.f32 %v556, %v553
      %v565 = vld [vmem:[%s492 + $0x1] sm:$0x1]
      %v566 = vld [vmem:[%s492 + $0x19] sm:$0x1]
      %v567 = vld [vmem:[%s492 + $0x31] sm:$0x1]
      %v568 = vld [vmem:[%s492 + $0x49] sm:$0x1]
      %v569 = vld [vmem:[%s492 + $0x61] sm:$0x1]
      %v570 = vld [vmem:[%s492 + $0x79] sm:$0x1]
      %v571 = vld [vmem:[%s492 + $0x91] sm:$0x1]
      %v572 = vld [vmem:[%s492 + $0xa9] sm:$0x1]
      %v573 = vlaneseq
      %v574 = vshrl.u32 %v573, 7
      %v575 = vsub.s32 0, %v574
      %v576 = vrot.slane %v565, %v575
      %578 = vbcast.lane.b32.xlu0 %v576, 256
      %v579 = vpop.permute.xlu0 %578
      %v580 = vlaneseq
      %v581 = vshrl.u32 %v580, 7
      %v582 = vsub.s32 0, %v581
      %v583 = vrot.slane %v566, %v582
      %585 = vbcast.lane.b32.xlu0 %v583, 256
      %v586 = vpop.permute.xlu0 %585
      %v587 = vlaneseq
      %v588 = vshrl.u32 %v587, 7
      %v589 = vsub.s32 0, %v588
      %v590 = vrot.slane %v567, %v589
      %592 = vbcast.lane.b32.xlu0 %v590, 256
      %v593 = vpop.permute.xlu0 %592
      %v594 = vlaneseq
      %v595 = vshrl.u32 %v594, 7
      %v596 = vsub.s32 0, %v595
      %v597 = vrot.slane %v568, %v596
      %599 = vbcast.lane.b32.xlu0 %v597, 256
      %v600 = vpop.permute.xlu0 %599
      %v601 = vlaneseq
      %v602 = vshrl.u32 %v601, 7
      %v603 = vsub.s32 0, %v602
      %v604 = vrot.slane %v569, %v603
      %606 = vbcast.lane.b32.xlu0 %v604, 256
      %v607 = vpop.permute.xlu0 %606
      %v608 = vlaneseq
      %v609 = vshrl.u32 %v608, 7
      %v610 = vsub.s32 0, %v609
      %v611 = vrot.slane %v570, %v610
      %613 = vbcast.lane.b32.xlu0 %v611, 256
      %v614 = vpop.permute.xlu0 %613
      %v615 = vlaneseq
      %v616 = vshrl.u32 %v615, 7
      %v617 = vsub.s32 0, %v616
      %v618 = vrot.slane %v571, %v617
      %620 = vbcast.lane.b32.xlu0 %v618, 256
      %v621 = vpop.permute.xlu0 %620
      %v622 = vlaneseq
      %v623 = vshrl.u32 %v622, 7
      %v624 = vsub.s32 0, %v623
      %v625 = vrot.slane %v572, %v624
      %627 = vbcast.lane.b32.xlu0 %v625, 256
      %v628 = vpop.permute.xlu0 %627
      %v629 = vmul.f32 %v579, %v576
      %v630 = vmul.f32 %v586, %v583
      %v631 = vmul.f32 %v593, %v590
      %v632 = vmul.f32 %v600, %v597
      %v633 = vmul.f32 %v607, %v604
      %v634 = vmul.f32 %v614, %v611
      %v635 = vmul.f32 %v621, %v618
      %v636 = vmul.f32 %v628, %v625
      %v637 = vadd.f32 %v557, %v629
      %v638 = vadd.f32 %v558, %v630
      %v639 = vadd.f32 %v559, %v631
      %v640 = vadd.f32 %v560, %v632
      %v641 = vadd.f32 %v561, %v633
      %v642 = vadd.f32 %v562, %v634
      %v643 = vadd.f32 %v563, %v635
      %v644 = vadd.f32 %v564, %v636
      %v645 = vld [vmem:[%s492 + $0x2] sm:$0x1]
      %v646 = vld [vmem:[%s492 + $0x1a] sm:$0x1]
      %v647 = vld [vmem:[%s492 + $0x32] sm:$0x1]
      %v648 = vld [vmem:[%s492 + $0x4a] sm:$0x1]
      %v649 = vld [vmem:[%s492 + $0x62] sm:$0x1]
      %v650 = vld [vmem:[%s492 + $0x7a] sm:$0x1]
      %v651 = vld [vmem:[%s492 + $0x92] sm:$0x1]
      %v652 = vld [vmem:[%s492 + $0xaa] sm:$0x1]
      %v653 = vlaneseq
      %v654 = vshrl.u32 %v653, 7
      %v655 = vsub.s32 0, %v654
      %v656 = vrot.slane %v645, %v655
      %658 = vbcast.lane.b32.xlu0 %v656, 256
      %v659 = vpop.permute.xlu0 %658
      %v660 = vlaneseq
      %v661 = vshrl.u32 %v660, 7
      %v662 = vsub.s32 0, %v661
      %v663 = vrot.slane %v646, %v662
      %665 = vbcast.lane.b32.xlu0 %v663, 256
      %v666 = vpop.permute.xlu0 %665
      %v667 = vlaneseq
      %v668 = vshrl.u32 %v667, 7
      %v669 = vsub.s32 0, %v668
      %v670 = vrot.slane %v647, %v669
      %672 = vbcast.lane.b32.xlu0 %v670, 256
      %v673 = vpop.permute.xlu0 %672
      %v674 = vlaneseq
      %v675 = vshrl.u32 %v674, 7
      %v676 = vsub.s32 0, %v675
      %v677 = vrot.slane %v648, %v676
      %679 = vbcast.lane.b32.xlu0 %v677, 256
      %v680 = vpop.permute.xlu0 %679
      %v681 = vlaneseq
      %v682 = vshrl.u32 %v681, 7
      %v683 = vsub.s32 0, %v682
      %v684 = vrot.slane %v649, %v683
      %686 = vbcast.lane.b32.xlu0 %v684, 256
      %v687 = vpop.permute.xlu0 %686
      %v688 = vlaneseq
      %v689 = vshrl.u32 %v688, 7
      %v690 = vsub.s32 0, %v689
      %v691 = vrot.slane %v650, %v690
      %693 = vbcast.lane.b32.xlu0 %v691, 256
      %v694 = vpop.permute.xlu0 %693
      %v695 = vlaneseq
      %v696 = vshrl.u32 %v695, 7
      %v697 = vsub.s32 0, %v696
      %v698 = vrot.slane %v651, %v697
      %700 = vbcast.lane.b32.xlu0 %v698, 256
      %v701 = vpop.permute.xlu0 %700
      %v702 = vlaneseq
      %v703 = vshrl.u32 %v702, 7
      %v704 = vsub.s32 0, %v703
      %v705 = vrot.slane %v652, %v704
      %707 = vbcast.lane.b32.xlu0 %v705, 256
      %v708 = vpop.permute.xlu0 %707
      %v709 = vmul.f32 %v659, %v656
      %v710 = vmul.f32 %v666, %v663
      %v711 = vmul.f32 %v673, %v670
      %v712 = vmul.f32 %v680, %v677
      %v713 = vmul.f32 %v687, %v684
      %v714 = vmul.f32 %v694, %v691
      %v715 = vmul.f32 %v701, %v698
      %v716 = vmul.f32 %v708, %v705
      %v717 = vadd.f32 %v637, %v709
      %v718 = vadd.f32 %v638, %v710
      %v719 = vadd.f32 %v639, %v711
      %v720 = vadd.f32 %v640, %v712
      %v721 = vadd.f32 %v641, %v713
      %v722 = vadd.f32 %v642, %v714
      %v723 = vadd.f32 %v643, %v715
      %v724 = vadd.f32 %v644, %v716
      %v725 = vld [vmem:[%s492 + $0x3] sm:$0x1]
      %v726 = vld [vmem:[%s492 + $0x1b] sm:$0x1]
      %v727 = vld [vmem:[%s492 + $0x33] sm:$0x1]
      %v728 = vld [vmem:[%s492 + $0x4b] sm:$0x1]
      %v729 = vld [vmem:[%s492 + $0x63] sm:$0x1]
      %v730 = vld [vmem:[%s492 + $0x7b] sm:$0x1]
      %v731 = vld [vmem:[%s492 + $0x93] sm:$0x1]
      %v732 = vld [vmem:[%s492 + $0xab] sm:$0x1]
      %v733 = vlaneseq
      %v734 = vshrl.u32 %v733, 7
      %v735 = vsub.s32 0, %v734
      %v736 = vrot.slane %v725, %v735
      %738 = vbcast.lane.b32.xlu0 %v736, 256
      %v739 = vpop.permute.xlu0 %738
      %v740 = vlaneseq
      %v741 = vshrl.u32 %v740, 7
      %v742 = vsub.s32 0, %v741
      %v743 = vrot.slane %v726, %v742
      %745 = vbcast.lane.b32.xlu0 %v743, 256
      %v746 = vpop.permute.xlu0 %745
      %v747 = vlaneseq
      %v748 = vshrl.u32 %v747, 7
      %v749 = vsub.s32 0, %v748
      %v750 = vrot.slane %v727, %v749
      %752 = vbcast.lane.b32.xlu0 %v750, 256
      %v753 = vpop.permute.xlu0 %752
      %v754 = vlaneseq
      %v755 = vshrl.u32 %v754, 7
      %v756 = vsub.s32 0, %v755
      %v757 = vrot.slane %v728, %v756
      %759 = vbcast.lane.b32.xlu0 %v757, 256
      %v760 = vpop.permute.xlu0 %759
      %v761 = vlaneseq
      %v762 = vshrl.u32 %v761, 7
      %v763 = vsub.s32 0, %v762
      %v764 = vrot.slane %v729, %v763
      %766 = vbcast.lane.b32.xlu0 %v764, 256
      %v767 = vpop.permute.xlu0 %766
      %v768 = vlaneseq
      %v769 = vshrl.u32 %v768, 7
      %v770 = vsub.s32 0, %v769
      %v771 = vrot.slane %v730, %v770
      %773 = vbcast.lane.b32.xlu0 %v771, 256
      %v774 = vpop.permute.xlu0 %773
      %v775 = vlaneseq
      %v776 = vshrl.u32 %v775, 7
      %v777 = vsub.s32 0, %v776
      %v778 = vrot.slane %v731, %v777
      %780 = vbcast.lane.b32.xlu0 %v778, 256
      %v781 = vpop.permute.xlu0 %780
      %v782 = vlaneseq
      %v783 = vshrl.u32 %v782, 7
      %v784 = vsub.s32 0, %v783
      %v785 = vrot.slane %v732, %v784
      %787 = vbcast.lane.b32.xlu0 %v785, 256
      %v788 = vpop.permute.xlu0 %787
      %v789 = vmul.f32 %v739, %v736
      %v790 = vmul.f32 %v746, %v743
      %v791 = vmul.f32 %v753, %v750
      %v792 = vmul.f32 %v760, %v757
      %v793 = vmul.f32 %v767, %v764
      %v794 = vmul.f32 %v774, %v771
      %v795 = vmul.f32 %v781, %v778
      %v796 = vmul.f32 %v788, %v785
      %v797 = vadd.f32 %v717, %v789
      %v798 = vadd.f32 %v718, %v790
      %v799 = vadd.f32 %v719, %v791
      %v800 = vadd.f32 %v720, %v792
      %v801 = vadd.f32 %v721, %v793
      %v802 = vadd.f32 %v722, %v794
      %v803 = vadd.f32 %v723, %v795
      %v804 = vadd.f32 %v724, %v796
      %v805 = vld [vmem:[%s492 + $0x4] sm:$0x1]
      %v806 = vld [vmem:[%s492 + $0x1c] sm:$0x1]
      %v807 = vld [vmem:[%s492 + $0x34] sm:$0x1]
      %v808 = vld [vmem:[%s492 + $0x4c] sm:$0x1]
      %v809 = vld [vmem:[%s492 + $0x64] sm:$0x1]
      %v810 = vld [vmem:[%s492 + $0x7c] sm:$0x1]
      %v811 = vld [vmem:[%s492 + $0x94] sm:$0x1]
      %v812 = vld [vmem:[%s492 + $0xac] sm:$0x1]
      %v813 = vlaneseq
      %v814 = vshrl.u32 %v813, 7
      %v815 = vsub.s32 0, %v814
      %v816 = vrot.slane %v805, %v815
      %818 = vbcast.lane.b32.xlu0 %v816, 256
      %v819 = vpop.permute.xlu0 %818
      %v820 = vlaneseq
      %v821 = vshrl.u32 %v820, 7
      %v822 = vsub.s32 0, %v821
      %v823 = vrot.slane %v806, %v822
      %825 = vbcast.lane.b32.xlu0 %v823, 256
      %v826 = vpop.permute.xlu0 %825
      %v827 = vlaneseq
      %v828 = vshrl.u32 %v827, 7
      %v829 = vsub.s32 0, %v828
      %v830 = vrot.slane %v807, %v829
      %832 = vbcast.lane.b32.xlu0 %v830, 256
      %v833 = vpop.permute.xlu0 %832
      %v834 = vlaneseq
      %v835 = vshrl.u32 %v834, 7
      %v836 = vsub.s32 0, %v835
      %v837 = vrot.slane %v808, %v836
      %839 = vbcast.lane.b32.xlu0 %v837, 256
      %v840 = vpop.permute.xlu0 %839
      %v841 = vlaneseq
      %v842 = vshrl.u32 %v841, 7
      %v843 = vsub.s32 0, %v842
      %v844 = vrot.slane %v809, %v843
      %846 = vbcast.lane.b32.xlu0 %v844, 256
      %v847 = vpop.permute.xlu0 %846
      %v848 = vlaneseq
      %v849 = vshrl.u32 %v848, 7
      %v850 = vsub.s32 0, %v849
      %v851 = vrot.slane %v810, %v850
      %853 = vbcast.lane.b32.xlu0 %v851, 256
      %v854 = vpop.permute.xlu0 %853
      %v855 = vlaneseq
      %v856 = vshrl.u32 %v855, 7
      %v857 = vsub.s32 0, %v856
      %v858 = vrot.slane %v811, %v857
      %860 = vbcast.lane.b32.xlu0 %v858, 256
      %v861 = vpop.permute.xlu0 %860
      %v862 = vlaneseq
      %v863 = vshrl.u32 %v862, 7
      %v864 = vsub.s32 0, %v863
      %v865 = vrot.slane %v812, %v864
      %867 = vbcast.lane.b32.xlu0 %v865, 256
      %v868 = vpop.permute.xlu0 %867
      %v869 = vmul.f32 %v819, %v816
      %v870 = vmul.f32 %v826, %v823
      %v871 = vmul.f32 %v833, %v830
      %v872 = vmul.f32 %v840, %v837
      %v873 = vmul.f32 %v847, %v844
      %v874 = vmul.f32 %v854, %v851
      %v875 = vmul.f32 %v861, %v858
      %v876 = vmul.f32 %v868, %v865
      %v877 = vadd.f32 %v797, %v869
      %v878 = vadd.f32 %v798, %v870
      %v879 = vadd.f32 %v799, %v871
      %v880 = vadd.f32 %v800, %v872
      %v881 = vadd.f32 %v801, %v873
      %v882 = vadd.f32 %v802, %v874
      %v883 = vadd.f32 %v803, %v875
      %v884 = vadd.f32 %v804, %v876
      %v885 = vmul.f32 %v877, 0.4472136
      %v886 = vmul.f32 %v878, 0.4472136
      %v887 = vmul.f32 %v879, 0.4472136
      %v888 = vmul.f32 %v880, 0.4472136
      %v889 = vmul.f32 %v881, 0.4472136
      %v890 = vmul.f32 %v882, 0.4472136
      %v891 = vmul.f32 %v883, 0.4472136
      %v892 = vmul.f32 %v884, 0.4472136
      %s893 = scalar_lea.vmem %s159, 8
      %894 = vst.msk [vmem:[%s893] sm:$0xf] %vm233, %v885
      %895 = vst.msk [vmem:[%s893 + $0xc] sm:$0xf] %vm233, %v886
      %896 = vst.msk [vmem:[%s893 + $0x18] sm:$0xf] %vm233, %v887
      %897 = vst.msk [vmem:[%s893 + $0x24] sm:$0xf] %vm233, %v888
      %898 = vst.msk [vmem:[%s893 + $0x30] sm:$0xf] %vm233, %v889
      %899 = vst.msk [vmem:[%s893 + $0x3c] sm:$0xf] %vm233, %v890
      %900 = vst.msk [vmem:[%s893 + $0x48] sm:$0xf] %vm233, %v891
      %901 = vst.msk [vmem:[%s893 + $0x54] sm:$0xf] %vm233, %v892
      %s902 = smul.u32 8, %s17
      %p903 = scmp.lt.s32.totalorder %s16, 1
      %s904 = scalar_select %p903, %s16, 1
      %p905 = scmp.lt.s32.totalorder %s902, 7
      %s906 = scalar_select %p905, %s902, 7
      %s907 = smul.addr %s906, 3
      %s908 = smul.addr %s904, 24
      %s909 = sadd.s32 %s907, %s908
      %s910 = smul.addr %s909, 4
      %s911 = scalar_lea.vmem %s1, %s910
      // Predicated region
      $region25: #{tpu_custom_call.1} parent=23 // pred_check
        %p912 = pneg %p72
      $region26: #{tpu_custom_call.1} parent=23 // pred_check_branch
        %914 = sbr.rel (%p912) target = $region28
      $region27: #{tpu_custom_call.1} parent=23 // pred_region
        %s915 = smul.u32 8, %s17
      $region28: #{tpu_custom_call.1} parent=23 // pred_fallthru
        _
    $region24: #{tpu_custom_call.1} parent=5 // pred_fallthru
      _
    %p916 = scmp.le.s32.totalorder 2, %s7
    // Predicated region
    $region29: #{tpu_custom_call.1} parent=5 // pred_check
      %p917 = pneg %p916
    $region30: #{tpu_custom_call.1} parent=5 // pred_check_branch
      %919 = sbr.rel (%p917) target = $region32
    $region31: #{tpu_custom_call.1} parent=5 // pred_region
      %s920 = ssub.s32 %s7, 2
      // Predicated region
      $region33: #{tpu_custom_call.1} parent=31 // pred_check
        %p921 = pneg %p78
      $region34: #{tpu_custom_call.1} parent=31 // pred_check_branch
        %923 = sbr.rel (%p921) target = $region36
      $region35: #{tpu_custom_call.1} parent=31 // pred_region
        %s924 = smul.u32 8, %s19
        %p925 = scmp.lt.s32.totalorder %s18, 1
        %s926 = scalar_select %p925, %s18, 1
        %p927 = scmp.lt.s32.totalorder %s924, 7
        %s928 = scalar_select %p927, %s924, 7
        %s929 = smul.addr %s928, 3
        %s930 = smul.addr %s926, 24
        %s931 = sadd.s32 %s929, %s930
        %s932 = smul.addr %s931, 4
        %s933 = scalar_lea.vmem %s1, %s932
      $region36: #{tpu_custom_call.1} parent=31 // pred_fallthru
        _
    $region32: #{tpu_custom_call.1} parent=5 // pred_fallthru
      _
  $region6: #{tpu_custom_call.1} parent=0 // loop_footer
    %s11 = sadd.s32 1, %s7
  $region7: #{tpu_custom_call.1} parent=0 // loop_footer_branch
    %6 = sbr.rel target = $region3
  $region8: #{tpu_custom_call.1} parent=0 // loop_exit
    _

</llo_original>
